<compile_context>
chip_gen: v7x
topology: tpu7x:2x2x1
jax: 0.10.0
libtpu: 0.0.40
codegen_flags: <defaults>
</compile_context>

<pallas_src>
import functools

import jax
import jax.numpy as jnp
from jax.experimental import pallas as pl
from jax.experimental.pallas import tpu as pltpu


def _round_up(x, m):
    return (x + m - 1) // m * m


# ---------------------------------------------------------------------------
# Kernel
# ---------------------------------------------------------------------------
def kr_dqn_kernel(
    state_ref,   # [tb, in_p]            (zero-padded input features)
    slots_ref,   # [tb, sym_p]           (pre-sliced slot block)
    flag_ref,    # [tb, lanes]           (sym_flag, zero-padded lanes)
    p_ref,       # [slab_rows, 2*lanes]  fused parameter slab
    out_ref,     # [tb, lanes]
    *,
    in_p, sym_p, lanes,
    o_w1, o_b1, o_w2, o_b2, o_kg, o_prio,
):
    state = state_ref[...]

    # ---- fc1 -> relu (static, 8-aligned / 128-lane-aligned slab views) -----
    w1 = p_ref[o_w1:o_w1 + in_p, 0:lanes]            # [in_p, lanes]
    b1 = p_ref[o_b1:o_b1 + 1, 0:lanes]               # [1, lanes]
    h = jnp.maximum(
        jnp.dot(state, w1, preferred_element_type=jnp.float32) + b1, 0.0)

    # ---- fused fc2 + relation branch: one matmul on [lanes, 2*lanes] -------
    #   cols [0:lanes)       -> x  = h @ w2  + b2
    #   cols [lanes:2*lanes) -> rel = h @ (w2 @ softmax(tran,0)) + b2 @ sm
    w2cat = p_ref[o_w2:o_w2 + lanes, :]               # [lanes, 2*lanes]
    b2cat = p_ref[o_b2:o_b2 + 1, :]                   # [1, 2*lanes]
    xr = jnp.dot(h, w2cat, preferred_element_type=jnp.float32) + b2cat
    sig = jax.nn.sigmoid(xr)                          # one EUP pass on both halves

    # ---- knowledge-graph branch: single matmul with precomputed W_kg -------
    slots = slots_ref[...]                            # [tb, sym_p]
    prio = p_ref[o_prio:o_prio + 1, 0:sym_p]          # [1, sym_p]
    prio_b = jnp.broadcast_to(prio, slots.shape)
    spp = jnp.where(slots == 0.0, prio_b, slots)
    spp = jnp.where(spp == -2.0, prio_b, spp)
    w_kg = p_ref[o_kg:o_kg + sym_p, 0:lanes]          # [sym_p, lanes]
    rule = jnp.dot(spp, w_kg, preferred_element_type=jnp.float32)

    # ---- combine (lane-dense store; padded lanes zeroed by flag padding) ---
    out = sig[:, 0:lanes] + sig[:, lanes:2 * lanes] + rule
    out_ref[...] = out * flag_ref[...]


# ---------------------------------------------------------------------------
# Host-side parameter folding & packing (do once at parameter-load time)
# ---------------------------------------------------------------------------
def prepare_kr_dqn_params(params, *, num_actions, dise_start, dise_num, sym_num):
    w1 = params["w1"].astype(jnp.float32)            # [in, hidden]
    b1 = params["b1"].astype(jnp.float32)            # [1, hidden]
    w2 = params["w2"].astype(jnp.float32)            # [hidden, act]
    b2 = params["b2"].astype(jnp.float32)            # [1, act]
    input_shape, hidden = w1.shape

    lanes = _round_up(max(hidden, num_actions, 128), 128)
    lanes2 = 2 * lanes
    in_p = _round_up(input_shape, 8)
    sym_p = _round_up(sym_num, 8)

    # Fold softmax(tran_mat, axis=0) into fc2 weights for the relation branch.
    tm_sm = jax.nn.softmax(params["tran_mat"].astype(jnp.float32), axis=0)
    w2_rel = w2 @ tm_sm
    b2_rel = b2 @ tm_sm

    # Fold KG placement chain into a single [sym_num, num_actions] matrix.
    sym_start = dise_start + dise_num
    place_dise = jnp.zeros((dise_num, num_actions), jnp.float32).at[
        jnp.arange(dise_num), dise_start + jnp.arange(dise_num)].set(1.0)
    place_sym = jnp.zeros((sym_num, num_actions), jnp.float32).at[
        jnp.arange(sym_num), sym_start + jnp.arange(sym_num)].set(1.0)
    w_kg = params["sym_dise_mat"].astype(jnp.float32) @ (
        place_dise + params["dise_sym_mat"].astype(jnp.float32) @ place_sym)

    # Pack everything into one lane-dense [rows, 2*lanes] slab,
    # 8-row-aligned segments.
    offs = {}
    row = 0

    def seg(name, nrows):
        nonlocal row
        offs[name] = row
        row += _round_up(nrows, 8)

    seg("w1", in_p)
    seg("b1", 1)
    seg("w2", lanes)      # [w2 | w2_rel] concatenated along lanes
    seg("b2", 1)          # [b2 | b2_rel]
    seg("kg", sym_p)
    seg("prio", 1)
    slab_rows = row

    slab = jnp.zeros((slab_rows, lanes2), jnp.float32)
    slab = slab.at[offs["w1"]:offs["w1"] + input_shape, :hidden].set(w1)
    slab = slab.at[offs["b1"], :hidden].set(b1.reshape(-1))
    slab = slab.at[offs["w2"]:offs["w2"] + hidden, :num_actions].set(w2)
    slab = slab.at[offs["w2"]:offs["w2"] + hidden,
                   lanes:lanes + num_actions].set(w2_rel)
    slab = slab.at[offs["b2"], :num_actions].set(b2.reshape(-1))
    slab = slab.at[offs["b2"], lanes:lanes + num_actions].set(b2_rel.reshape(-1))
    slab = slab.at[offs["kg"]:offs["kg"] + sym_num, :num_actions].set(w_kg)
    slab = slab.at[offs["prio"], :sym_num].set(params["sym_prio"].reshape(-1))

    meta = dict(offsets=offs, lanes=lanes, lanes2=lanes2, in_p=in_p,
                sym_p=sym_p, slab_rows=slab_rows)
    return slab, meta


# ---------------------------------------------------------------------------
# Forward wrapper
# ---------------------------------------------------------------------------
def kr_dqn_forward(state, sym_flag, slab, meta, *, act_cardinality,
                   slot_cardinality, dise_num, sym_num, num_actions,
                   block_b=256):
    B, input_shape = state.shape
    lanes, lanes2 = meta["lanes"], meta["lanes2"]
    in_p, sym_p = meta["in_p"], meta["sym_p"]
    offs, slab_rows = meta["offsets"], meta["slab_rows"]

    slot_lo = 2 * act_cardinality + dise_num + 1
    slot_hi = 2 * act_cardinality + slot_cardinality
    assert slot_hi - slot_lo == sym_num

    # Pre-slice slots in the wrapper (cheap XLA slice; keeps the kernel free of
    # the unaligned 13:21 lane slice).  Keep the ==0 / ==-2 selects in-kernel.
    slots = state[:, slot_lo:slot_hi].astype(jnp.float32)

    # Batch tiling: 8-aligned row tile, padded batch, "parallel" grid axis.
    tile_b = min(_round_up(B, 8), block_b)
    b_pad = _round_up(B, tile_b)

    def pad2(x, rows, cols):
        return jnp.pad(x, ((0, rows - x.shape[0]), (0, cols - x.shape[1])))

    state_p = pad2(state.astype(jnp.float32), b_pad, in_p)
    slots_p = pad2(slots, b_pad, sym_p)
    flag_p = pad2(sym_flag.astype(jnp.float32), b_pad, lanes)  # zero-padded lanes

    kernel = functools.partial(
        kr_dqn_kernel,
        in_p=in_p, sym_p=sym_p, lanes=lanes,
        o_w1=offs["w1"], o_b1=offs["b1"], o_w2=offs["w2"], o_b2=offs["b2"],
        o_kg=offs["kg"], o_prio=offs["prio"])

    out = pl.pallas_call(
        kernel,
        out_shape=jax.ShapeDtypeStruct((b_pad, lanes), jnp.float32),
        grid=(b_pad // tile_b,),
        in_specs=[
            pl.BlockSpec((tile_b, in_p), lambda i: (i, 0)),
            pl.BlockSpec((tile_b, sym_p), lambda i: (i, 0)),
            pl.BlockSpec((tile_b, lanes), lambda i: (i, 0)),
            pl.BlockSpec((slab_rows, lanes2), lambda i: (0, 0)),  # resident slab
        ],
        out_specs=pl.BlockSpec((tile_b, lanes), lambda i: (i, 0)),
        compiler_params=pltpu.CompilerParams(
            dimension_semantics=("parallel",)),
    )(state_p, slots_p, flag_p, slab)

    return out[:B, :num_actions]


# ---------------------------------------------------------------------------
# Pure-JAX reference (mirrors the PyTorch forward, unfused)
# ---------------------------------------------------------------------------
def kr_dqn_reference(state, sym_flag, params, *, act_cardinality,
                     slot_cardinality, dise_start, dise_num, sym_num,
                     num_actions):
    slot_lo = 2 * act_cardinality + dise_num + 1
    slot_hi = 2 * act_cardinality + slot_cardinality
    h = jax.nn.relu(state @ params["w1"] + params["b1"])
    x = h @ params["w2"] + params["b2"]
    slots = state[:, slot_lo:slot_hi]
    prio = jnp.broadcast_to(params["sym_prio"], slots.shape)
    spp = jnp.where(slots == 0.0, prio, slots)
    spp = jnp.where(spp == -2.0, prio, spp)
    dise_prob = spp @ params["sym_dise_mat"]
    sym_prob = dise_prob @ params["dise_sym_mat"]
    action = jnp.zeros((state.shape[0], num_actions), jnp.float32)
    action = action.at[:, dise_start:dise_start + dise_num].set(dise_prob)
    action = action.at[:, dise_start + dise_num:].set(sym_prob)
    rel = x @ jax.nn.softmax(params["tran_mat"], axis=0)
    return (jax.nn.sigmoid(x) + jax.nn.sigmoid(rel) + action) * sym_flag


if __name__ == "__main__":
    # ---- small synthetic configuration (consistent with the module) --------
    batch = 2
    act_cardinality = 4
    dise_num = 4
    sym_num = 8
    slot_cardinality = dise_num + 1 + sym_num          # 13
    dise_start = 2
    num_actions = dise_start + dise_num + sym_num      # 14
    input_shape = 24                                    # >= 2*act + slot_card = 21
    hidden_size = 32

    key = jax.random.PRNGKey(0)
    keys = jax.random.split(key, 10)

    # deterministic "PyTorch-like" parameter init
    s1 = 1.0 / jnp.sqrt(jnp.float32(input_shape))
    s2 = 1.0 / jnp.sqrt(jnp.float32(hidden_size))
    w1 = jax.random.uniform(keys[0], (input_shape, hidden_size), jnp.float32, -s1, s1)
    b1 = jax.random.uniform(keys[1], (1, hidden_size), jnp.float32, -s1, s1)
    w2 = jax.random.uniform(keys[2], (hidden_size, num_actions), jnp.float32, -s2, s2)
    b2 = jax.random.uniform(keys[3], (1, num_actions), jnp.float32, -s2, s2)
    tran_mat = jax.random.uniform(keys[4], (num_actions, num_actions), jnp.float32, -0.5, 0.5)

    # knowledge-graph probability tables
    sym_dise = jax.random.uniform(keys[5], (sym_num, dise_num), jnp.float32)
    sym_dise = sym_dise / jnp.sum(sym_dise, axis=1, keepdims=True)
    dise_sym = jax.random.uniform(keys[6], (dise_num, sym_num), jnp.float32)
    dise_sym = dise_sym / jnp.sum(dise_sym, axis=1, keepdims=True)
    sym_prio = jax.random.uniform(keys[7], (1, sym_num), jnp.float32)

    params = dict(w1=w1, b1=b1, w2=w2, b2=b2, tran_mat=tran_mat,
                  sym_dise_mat=sym_dise, dise_sym_mat=dise_sym,
                  sym_prio=sym_prio)

    # inputs: state contains 0 / 1 / -2 entries (as in KRDS slot encodings)
    state = jax.random.choice(keys[8], jnp.array([0.0, 1.0, -2.0], jnp.float32),
                              shape=(batch, input_shape))
    sym_flag = jax.random.choice(keys[9], jnp.array([0.0, 1.0], jnp.float32),
                                 shape=(batch, num_actions))

    dims = dict(act_cardinality=act_cardinality, slot_cardinality=slot_cardinality,
                dise_num=dise_num, sym_num=sym_num, num_actions=num_actions)

    # one-time host-side folding/packing of parameters
    slab, meta = prepare_kr_dqn_params(
        params, num_actions=num_actions, dise_start=dise_start,
        dise_num=dise_num, sym_num=sym_num)

    out = kr_dqn_forward(state, sym_flag, slab, meta, **dims)
    out = jax.block_until_ready(out)

    ref = kr_dqn_reference(state, sym_flag, params, dise_start=dise_start, **dims)
    assert out.shape == (batch, num_actions)
    assert jnp.allclose(out, ref, atol=1e-5, rtol=1e-5), "mismatch vs reference"

    print("KERNEL_OK")
</pallas_src>

<mosaic_0001>
module attributes {stable_mosaic.version = 11 : i64} {
  func.func @kr_dqn_kernel(%arg0: i32, %arg1: memref<8x24xf32, #tpu.memory_space<vmem>>, %arg2: memref<8x8xf32, #tpu.memory_space<vmem>>, %arg3: memref<8x128xf32, #tpu.memory_space<vmem>>, %arg4: memref<184x256xf32, #tpu.memory_space<vmem>>, %arg5: memref<8x128xf32, #tpu.memory_space<vmem>>) attributes {dimension_semantics = [#tpu.dimension_semantics<parallel>], iteration_bounds = array<i64: 1>, scalar_prefetch = 0 : i64, scratch_operands = 0 : i64, tpu.core_type = #tpu.core_type<tc>, window_params = [{transform_indices = @transform_0, window_bounds = array<i64: 8, 24>}, {transform_indices = @transform_1, window_bounds = array<i64: 8, 8>}, {transform_indices = @transform_2, window_bounds = array<i64: 8, 128>}, {pipeline_mode = #tpu.pipeline_mode<synchronous>, transform_indices = @transform_3, window_bounds = array<i64: 184, 256>}, {transform_indices = @transform_4, window_bounds = array<i64: 8, 128>}]} {
    %c0 = arith.constant 0 : index
    %c0_0 = arith.constant 0 : index
    %0 = vector.load %arg1[%c0, %c0_0] : memref<8x24xf32, #tpu.memory_space<vmem>>, vector<8x24xf32>
    %c0_1 = arith.constant 0 : index
    %c0_2 = arith.constant 0 : index
    %1 = vector.load %arg4[%c0_1, %c0_2] : memref<184x256xf32, #tpu.memory_space<vmem>>, vector<24x128xf32>
    %c24 = arith.constant 24 : index
    %c0_3 = arith.constant 0 : index
    %2 = vector.load %arg4[%c24, %c0_3] : memref<184x256xf32, #tpu.memory_space<vmem>>, vector<1x128xf32>
    %cst = arith.constant dense<0.000000e+00> : vector<8x128xf32>
    %3 = tpu.matmul %0, %1, %cst {dimension_numbers = #tpu.dot_dimension_numbers<[1], [0], [0], [1], [0, 0, 1, 1], [], []>} : vector<8x24xf32>, vector<24x128xf32>, vector<8x128xf32> -> vector<8x128xf32>
    %4 = vector.broadcast %2 : vector<1x128xf32> to vector<8x128xf32>
    %5 = arith.addf %3, %4 : vector<8x128xf32>
    %cst_4 = arith.constant 0.000000e+00 : f32
    %6 = vector.broadcast %cst_4 : f32 to vector<8x128xf32>
    %7 = arith.maximumf %5, %6 : vector<8x128xf32>
    %c32 = arith.constant 32 : index
    %c0_5 = arith.constant 0 : index
    %8 = vector.load %arg4[%c32, %c0_5] : memref<184x256xf32, #tpu.memory_space<vmem>>, vector<128x256xf32>
    %c160 = arith.constant 160 : index
    %c0_6 = arith.constant 0 : index
    %9 = vector.load %arg4[%c160, %c0_6] : memref<184x256xf32, #tpu.memory_space<vmem>>, vector<1x256xf32>
    %cst_7 = arith.constant dense<0.000000e+00> : vector<8x256xf32>
    %10 = tpu.matmul %7, %8, %cst_7 {dimension_numbers = #tpu.dot_dimension_numbers<[1], [0], [0], [1], [0, 0, 1, 1], [], []>} : vector<8x128xf32>, vector<128x256xf32>, vector<8x256xf32> -> vector<8x256xf32>
    %11 = vector.broadcast %9 : vector<1x256xf32> to vector<8x256xf32>
    %12 = arith.addf %10, %11 : vector<8x256xf32>
    %13 = arith.negf %12 : vector<8x256xf32>
    %14 = math.exp %13 : vector<8x256xf32>
    %cst_8 = arith.constant 1.000000e+00 : f32
    %15 = vector.broadcast %cst_8 : f32 to vector<8x256xf32>
    %16 = arith.addf %15, %14 : vector<8x256xf32>
    %17 = arith.divf %15, %16 : vector<8x256xf32>
    %c0_9 = arith.constant 0 : index
    %c0_10 = arith.constant 0 : index
    %18 = vector.load %arg2[%c0_9, %c0_10] : memref<8x8xf32, #tpu.memory_space<vmem>>, vector<8x8xf32>
    %c176 = arith.constant 176 : index
    %c0_11 = arith.constant 0 : index
    %19 = vector.load %arg4[%c176, %c0_11] : memref<184x256xf32, #tpu.memory_space<vmem>>, vector<1x8xf32>
    %20 = vector.shape_cast %19 : vector<1x8xf32> to vector<1x8xf32>
    %21 = vector.broadcast %20 : vector<1x8xf32> to vector<8x8xf32>
    %cst_12 = arith.constant 0.000000e+00 : f32
    %22 = vector.broadcast %cst_12 : f32 to vector<8x8xf32>
    %23 = arith.cmpf oeq, %18, %22 : vector<8x8xf32>
    %24 = arith.select %23, %21, %18 : vector<8x8xi1>, vector<8x8xf32>
    %cst_13 = arith.constant -2.000000e+00 : f32
    %25 = vector.broadcast %cst_13 : f32 to vector<8x8xf32>
    %26 = arith.cmpf oeq, %24, %25 : vector<8x8xf32>
    %27 = arith.select %26, %21, %24 : vector<8x8xi1>, vector<8x8xf32>
    %c168 = arith.constant 168 : index
    %c0_14 = arith.constant 0 : index
    %28 = vector.load %arg4[%c168, %c0_14] : memref<184x256xf32, #tpu.memory_space<vmem>>, vector<8x128xf32>
    %cst_15 = arith.constant dense<0.000000e+00> : vector<8x128xf32>
    %29 = tpu.matmul %27, %28, %cst_15 {dimension_numbers = #tpu.dot_dimension_numbers<[1], [0], [0], [1], [0, 0, 1, 1], [], []>} : vector<8x8xf32>, vector<8x128xf32>, vector<8x128xf32> -> vector<8x128xf32>
    %30 = vector.extract_strided_slice %17 {offsets = [0, 0], sizes = [8, 128], strides = [1, 1]} : vector<8x256xf32> to vector<8x128xf32>
    %31 = vector.extract_strided_slice %17 {offsets = [0, 128], sizes = [8, 128], strides = [1, 1]} : vector<8x256xf32> to vector<8x128xf32>
    %32 = arith.addf %30, %31 : vector<8x128xf32>
    %33 = arith.addf %32, %29 : vector<8x128xf32>
    %c0_16 = arith.constant 0 : index
    %c0_17 = arith.constant 0 : index
    %34 = vector.load %arg3[%c0_16, %c0_17] : memref<8x128xf32, #tpu.memory_space<vmem>>, vector<8x128xf32>
    %35 = arith.mulf %33, %34 : vector<8x128xf32>
    %c0_18 = arith.constant 0 : index
    %c0_19 = arith.constant 0 : index
    %36 = vector.load %arg5[%c0_18, %c0_19] : memref<8x128xf32, #tpu.memory_space<vmem>>, vector<8x128xf32>
    tpu.vector_store %arg5[%c0_18, %c0_19], %35 {strides = array<i32>} : memref<8x128xf32, #tpu.memory_space<vmem>>, vector<8x128xf32>,
    return
  }
  func.func @transform_0(%arg0: i32) -> (i32, i32) {
    %c0_i32 = arith.constant 0 : i32
    %c0_i32_0 = arith.constant 0 : i32
    return %arg0, %c0_i32 : i32, i32
  }
  func.func @transform_1(%arg0: i32) -> (i32, i32) {
    %c0_i32 = arith.constant 0 : i32
    %c0_i32_0 = arith.constant 0 : i32
    return %arg0, %c0_i32 : i32, i32
  }
  func.func @transform_2(%arg0: i32) -> (i32, i32) {
    %c0_i32 = arith.constant 0 : i32
    %c0_i32_0 = arith.constant 0 : i32
    return %arg0, %c0_i32 : i32, i32
  }
  func.func @transform_3(%arg0: i32) -> (i32, i32) {
    %c0_i32 = arith.constant 0 : i32
    %c0_i32_0 = arith.constant 0 : i32
    %c0_i32_1 = arith.constant 0 : i32
    return %c0_i32, %c0_i32_0 : i32, i32
  }
  func.func @transform_4(%arg0: i32) -> (i32, i32) {
    %c0_i32 = arith.constant 0 : i32
    %c0_i32_0 = arith.constant 0 : i32
    return %arg0, %c0_i32 : i32, i32
  }
}

</mosaic_0001>

<llo_original>
// kernel: tpu_custom_call.1
$region0: #{tpu_custom_call.1}
  #allocation0 [shape = 'u32[]', space=smem, size = 0x4, offset = 0x4, fixed_abs, tag = 'smem constant byte address 0x4 - core index']
  #allocation1 [shape = 'u32[144,128]{1,0:T(1,128)}', space=vmem, size = 0x12000, scoped, tag = 'internal scratch']
  %s0 = inlined_call_operand.hbm [shape: f32[8,24], index: 0, kind: input, shape index: {}]
  %s1 = inlined_call_operand.hbm [shape: f32[8,8], index: 1, kind: input, shape index: {}]
  %s2 = inlined_call_operand.hbm [shape: f32[8,128], index: 2, kind: input, shape index: {}]
  %s3 = inlined_call_operand.hbm [shape: f32[184,256], index: 3, kind: input, shape index: {}]
  %s4 = inlined_call_operand.hbm [shape: f32[8,128], index: 4, kind: output, shape index: {}]
  %s5 = sld [smem:[#allocation0]]
  $region42: #{tpu_custom_call.1} parent=0
    _
  %s7 = ssub.s32 1, %s5
  %s8 = scalar_select 0, %s7, %s5
  $region1: #{tpu_custom_call.1} parent=0
    #allocation2 [shape = 'u8[4096]{0}', space=vmem, size = 0x1000, scoped, tag = 'input window, operand 0, single buffered']
    #allocation3 [shape = 's32[1]{0}', space=sflag, size = 0x4, scoped, tag = 'scoped memory for tpu_custom_call.1']
    #allocation4 [shape = 's32[1]{0}', space=sflag, size = 0x4, scoped, tag = 'scoped memory for tpu_custom_call.1']
    #allocation5 [shape = 'u8[4096]{0}', space=vmem, size = 0x1000, scoped, tag = 'input window, operand 1, single buffered']
    #allocation6 [shape = 's32[1]{0}', space=sflag, size = 0x4, scoped, tag = 'scoped memory for tpu_custom_call.1']
    #allocation7 [shape = 'u8[4096]{0}', space=vmem, size = 0x1000, scoped, tag = 'input window, operand 2, single buffered']
    #allocation8 [shape = 'u8[188416]{0}', space=vmem, size = 0x2e000, scoped, tag = 'input window, operand 3, single buffered']
    #allocation9 [shape = 's32[1]{0}', space=sflag, size = 0x4, scoped, tag = 'scoped memory for tpu_custom_call.1']
    #allocation10 [shape = 'u8[4096]{0}', space=vmem, size = 0x1000, scoped, tag = 'output window, operand 0, single buffered']
    %9 = vsyncpa [#allocation3], 0
    %10 = vsyncpa [#allocation6], 0
    %11 = vsyncpa [#allocation9], 0
    %12 = vsyncpa [#allocation4], 0
    // Predicated region
    $region2: #{tpu_custom_call.1} parent=1 // pred_check
      _
    $region3: #{tpu_custom_call.1} parent=1 // pred_check_branch
      %14 = sbr.rel (0) target = $region5
    $region4: #{tpu_custom_call.1} parent=1 // pred_region
      %s16 = ssub.s32 128, 128
      %17 = vsyncadd [#allocation3], %s16
      %s19 = sshll.u32 [#allocation2], 4
      %s20 = int_to_ptr.vmem [resolvable:$true] %s19
      %22 = dma.hbm_to_vmem [thread:$0]  %s0, 128, %s20, [#allocation3]
    $region5: #{tpu_custom_call.1} parent=1 // pred_fallthru
      _
    // Predicated region
    $region6: #{tpu_custom_call.1} parent=1 // pred_check
      _
    $region7: #{tpu_custom_call.1} parent=1 // pred_check_branch
      %24 = sbr.rel (0) target = $region9
    $region8: #{tpu_custom_call.1} parent=1 // pred_region
      %s26 = ssub.s32 128, 128
      %27 = vsyncadd [#allocation6], %s26
      %s29 = sshll.u32 [#allocation5], 4
      %s30 = int_to_ptr.vmem [resolvable:$true] %s29
      %32 = dma.hbm_to_vmem [thread:$0]  %s1, 128, %s30, [#allocation6]
    $region9: #{tpu_custom_call.1} parent=1 // pred_fallthru
      _
    // Predicated region
    $region10: #{tpu_custom_call.1} parent=1 // pred_check
      _
    $region11: #{tpu_custom_call.1} parent=1 // pred_check_branch
      %34 = sbr.rel (0) target = $region13
    $region12: #{tpu_custom_call.1} parent=1 // pred_region
      %s36 = ssub.s32 128, 128
      %37 = vsyncadd [#allocation6], %s36
      %s39 = sshll.u32 [#allocation7], 4
      %s40 = int_to_ptr.vmem [resolvable:$true] %s39
      %42 = dma.hbm_to_vmem [thread:$0]  %s2, 128, %s40, [#allocation6]
    $region13: #{tpu_custom_call.1} parent=1 // pred_fallthru
      _
    // Predicated region
    $region14: #{tpu_custom_call.1} parent=1 // pred_check
      _
    $region15: #{tpu_custom_call.1} parent=1 // pred_check_branch
      %44 = sbr.rel (0) target = $region17
    $region16: #{tpu_custom_call.1} parent=1 // pred_region
      %s46 = ssub.s32 5888, 5888
      %47 = vsyncadd [#allocation9], %s46
      %s48 = sshll.u32 [#allocation8], 4
      %s49 = int_to_ptr.vmem [resolvable:$true] %s48
      %54 = dma.hbm_to_vmem [thread:$0]  %s3, 5888, %s49, [#allocation9], 256, 256, 16
    $region17: #{tpu_custom_call.1} parent=1 // pred_fallthru
      _
    // Predicated region
    $region18: #{tpu_custom_call.1} parent=1 // pred_check
      _
    $region19: #{tpu_custom_call.1} parent=1 // pred_check_branch
      %56 = sbr.rel (0) target = $region21
    $region20: #{tpu_custom_call.1} parent=1 // pred_region
      %57 = dma.done [#allocation3], 128
    $region21: #{tpu_custom_call.1} parent=1 // pred_fallthru
      _
    // Predicated region
    $region22: #{tpu_custom_call.1} parent=1 // pred_check
      _
    $region23: #{tpu_custom_call.1} parent=1 // pred_check_branch
      %59 = sbr.rel (0) target = $region25
    $region24: #{tpu_custom_call.1} parent=1 // pred_region
      %60 = dma.done [#allocation6], 128
    $region25: #{tpu_custom_call.1} parent=1 // pred_fallthru
      _
    // Predicated region
    $region26: #{tpu_custom_call.1} parent=1 // pred_check
      _
    $region27: #{tpu_custom_call.1} parent=1 // pred_check_branch
      %62 = sbr.rel (0) target = $region29
    $region28: #{tpu_custom_call.1} parent=1 // pred_region
      %63 = dma.done [#allocation6], 128
    $region29: #{tpu_custom_call.1} parent=1 // pred_fallthru
      _
    // Predicated region
    $region30: #{tpu_custom_call.1} parent=1 // pred_check
      _
    $region31: #{tpu_custom_call.1} parent=1 // pred_check_branch
      %65 = sbr.rel (0) target = $region33
    $region32: #{tpu_custom_call.1} parent=1 // pred_region
      %66 = dma.done [#allocation9], 5888
    $region33: #{tpu_custom_call.1} parent=1 // pred_fallthru
      _
    %v67 = vld [vmem:[#allocation2] sm:$0xff]
    %v68 = vld [vmem:[#allocation8] sm:$0xff]
    %v69 = vld [vmem:[#allocation8 + $0x10] sm:$0xff]
    %v70 = vld [vmem:[#allocation8 + $0x20] sm:$0xff]
    %v71 = vld [vmem:[#allocation8 + $0x30] ss:$0 sm:$0xff]
    %vm72 = vcmask 195584
    %v74 = vsel %vm72, %v67, 0
    %76 = vmatprep.subr.mxu0 0.0
    %77 = vmatpush1.msra.mxu0 %v68
    %78 = vmatprep.subr.mxu0 0.0
    %79 = vmatpush1.msra.mxu0 %v69
    %80 = vmatprep.subr.mxu0 0.0
    %81 = vmatpush1.msra.mxu0 %v70
    %82 = vmatprep.subr.mxu0 0.0
    %83 = vmatpush1.msra.mxu0 0.0
    %84 = vmatprep.subr.mxu0 0.0
    %85 = vmatpush1.msra.mxu0 0.0
    %86 = vmatprep.subr.mxu0 0.0
    %87 = vmatpush1.msra.mxu0 0.0
    %88 = vmatprep.subr.mxu0 0.0
    %89 = vmatpush1.msra.mxu0 0.0
    %90 = vmatprep.subr.mxu0 0.0
    %91 = vmatpush1.msra.mxu0 0.0
    %92 = vmatprep.subr.mxu0 0.0
    %93 = vmatpush1.msra.mxu0 0.0
    %94 = vmatprep.subr.mxu0 0.0
    %95 = vmatpush1.msra.mxu0 0.0
    %96 = vmatprep.subr.mxu0 0.0
    %97 = vmatpush1.msra.mxu0 0.0
    %98 = vmatprep.subr.mxu0 0.0
    %99 = vmatpush1.msra.mxu0 0.0
    %100 = vmatprep.subr.mxu0 0.0
    %101 = vmatpush1.msra.mxu0 0.0
    %102 = vmatprep.subr.mxu0 0.0
    %103 = vmatpush1.msra.mxu0 0.0
    %104 = vmatprep.subr.mxu0 0.0
    %105 = vmatpush1.msra.mxu0 0.0
    %106 = vmatprep.subr.mxu0 0.0
    %107 = vmatpush1.msra.mxu0 0.0
    %108 = vmatprep.subr.mxu0 0.0
    %109 = vmatpush1.msra.mxu0 0.0
    %110 = vmatprep.subr.mxu0 0.0
    %111 = vmatpush1.msra.mxu0 0.0
    %112 = vmatprep.subr.mxu0 0.0
    %113 = vmatpush1.msra.mxu0 0.0
    %114 = vmatprep.subr.mxu0 0.0
    %115 = vmatpush1.msra.mxu0 0.0
    %116 = vmatprep.subr.mxu0 0.0
    %117 = vmatpush1.msra.mxu0 0.0
    %118 = vmatprep.subr.mxu0 0.0
    %119 = vmatpush1.msra.mxu0 0.0
    %120 = vmatprep.subr.mxu0 0.0
    %121 = vmatpush1.msra.mxu0 0.0
    %122 = vmatprep.subr.mxu0 0.0
    %123 = vmatpush1.msra.mxu0 0.0
    %124 = vmatprep.subr.mxu0 0.0
    %125 = vmatpush1.msra.mxu0 0.0
    %126 = vmatprep.subr.mxu0 0.0
    %127 = vmatpush1.msra.mxu0 0.0
    %128 = vmatprep.subr.mxu0 0.0
    %129 = vmatpush1.msra.mxu0 0.0
    %130 = vmatprep.subr.mxu0 0.0
    %131 = vmatpush1.msra.mxu0 0.0
    %132 = vmatprep.subr.mxu0 0.0
    %133 = vmatpush1.msra.mxu0 0.0
    %134 = vmatprep.subr.mxu0 0.0
    %135 = vmatpush1.msra.mxu0 0.0
    %136 = vmatprep.subr.mxu0 0.0
    %137 = vmatpush1.msra.mxu0 0.0
    %138 = vmatprep.subr.mxu0 0.0
    %139 = vmatpush1.msra.mxu0 0.0
    %140 = vmatprep.mubr.f32.mxu0 0.0
    %141 = vmatmul.mubr.f32.gmra.mrb[0].mxu0 %v74
    %v142 = vpop.f32.mrb[0].mxu0
    %v143 = vadd.f32 %v71, %v142
    %v144 = vpop.f32.mrb[0].mxu0
    %145 = vdwg.mxu0
    %v146 = vmax.f32 %v143, 0.0
    %v147 = vld [vmem:[#allocation8 + $0x40] sm:$0xff]
    %v148 = vld [vmem:[#allocation8 + $0x48] sm:$0xff]
    %v149 = vld [vmem:[#allocation8 + $0x50] sm:$0xff]
    %v150 = vld [vmem:[#allocation8 + $0x58] sm:$0xff]
    %v151 = vld [vmem:[#allocation8 + $0x60] sm:$0xff]
    %v152 = vld [vmem:[#allocation8 + $0x68] sm:$0xff]
    %v153 = vld [vmem:[#allocation8 + $0x70] sm:$0xff]
    %v154 = vld [vmem:[#allocation8 + $0x78] sm:$0xff]
    %v155 = vld [vmem:[#allocation8 + $0x80] sm:$0xff]
    %v156 = vld [vmem:[#allocation8 + $0x88] sm:$0xff]
    %v157 = vld [vmem:[#allocation8 + $0x90] sm:$0xff]
    %v158 = vld [vmem:[#allocation8 + $0x98] sm:$0xff]
    %v159 = vld [vmem:[#allocation8 + $0xa0] sm:$0xff]
    %v160 = vld [vmem:[#allocation8 + $0xa8] sm:$0xff]
    %v161 = vld [vmem:[#allocation8 + $0xb0] sm:$0xff]
    %v162 = vld [vmem:[#allocation8 + $0xb8] sm:$0xff]
    %v163 = vld [vmem:[#allocation8 + $0xc0] sm:$0xff]
    %v164 = vld [vmem:[#allocation8 + $0xc8] sm:$0xff]
    %v165 = vld [vmem:[#allocation8 + $0xd0] sm:$0xff]
    %v166 = vld [vmem:[#allocation8 + $0xd8] sm:$0xff]
    %v167 = vld [vmem:[#allocation8 + $0xe0] sm:$0xff]
    %v168 = vld [vmem:[#allocation8 + $0xe8] sm:$0xff]
    %v169 = vld [vmem:[#allocation8 + $0xf0] sm:$0xff]
    %v170 = vld [vmem:[#allocation8 + $0xf8] sm:$0xff]
    %v171 = vld [vmem:[#allocation8 + $0x100] sm:$0xff]
    %v172 = vld [vmem:[#allocation8 + $0x108] sm:$0xff]
    %v173 = vld [vmem:[#allocation8 + $0x110] sm:$0xff]
    %v174 = vld [vmem:[#allocation8 + $0x118] sm:$0xff]
    %v175 = vld [vmem:[#allocation8 + $0x120] sm:$0xff]
    %v176 = vld [vmem:[#allocation8 + $0x128] sm:$0xff]
    %v177 = vld [vmem:[#allocation8 + $0x130] sm:$0xff]
    %v178 = vld [vmem:[#allocation8 + $0x138] sm:$0xff]
    %s179 = scalar_lea.vmem [#allocation8], 320
    %v180 = vld [vmem:[%s179] ss:$8 sm:$0x3]
    %v182 = vlaneseq
    %v183 = vshrl.u32 %v182, 7
    %v184 = vsub.s32 0, %v183
    %v185 = vrot.slane %v180, %v184
    %v186 = vlaneseq
    %v187 = vshrl.u32 %v186, 7
    %v188 = vsub.s32 1, %v187
    %v189 = vrot.slane %v180, %v188
    %192 = vmatprep.subr.mxu0 %v148
    %193 = vmatpush1.msra.mxu0 %v147
    %194 = vmatprep.subr.mxu0 %v150
    %195 = vmatpush1.msra.mxu0 %v149
    %196 = vmatprep.subr.mxu0 %v152
    %197 = vmatpush1.msra.mxu0 %v151
    %198 = vmatprep.subr.mxu0 %v154
    %199 = vmatpush1.msra.mxu0 %v153
    %200 = vmatprep.subr.mxu0 %v156
    %201 = vmatpush1.msra.mxu0 %v155
    %202 = vmatprep.subr.mxu0 %v158
    %203 = vmatpush1.msra.mxu0 %v157
    %204 = vmatprep.subr.mxu0 %v160
    %205 = vmatpush1.msra.mxu0 %v159
    %206 = vmatprep.subr.mxu0 %v162
    %207 = vmatpush1.msra.mxu0 %v161
    %208 = vmatprep.subr.mxu0 %v164
    %209 = vmatpush1.msra.mxu0 %v163
    %210 = vmatprep.subr.mxu0 %v166
    %211 = vmatpush1.msra.mxu0 %v165
    %212 = vmatprep.subr.mxu0 %v168
    %213 = vmatpush1.msra.mxu0 %v167
    %214 = vmatprep.subr.mxu0 %v170
    %215 = vmatpush1.msra.mxu0 %v169
    %216 = vmatprep.subr.mxu0 %v172
    %217 = vmatpush1.msra.mxu0 %v171
    %218 = vmatprep.subr.mxu0 %v174
    %219 = vmatpush1.msra.mxu0 %v173
    %220 = vmatprep.subr.mxu0 %v176
    %221 = vmatpush1.msra.mxu0 %v175
    %222 = vmatprep.subr.mxu0 %v178
    %223 = vmatpush1.msra.mxu0 %v177
    %224 = vmatprep.subr.mxu0 0.0
    %225 = vmatpush1.msra.mxu0 0.0
    %226 = vmatprep.subr.mxu0 0.0
    %227 = vmatpush1.msra.mxu0 0.0
    %228 = vmatprep.subr.mxu0 0.0
    %229 = vmatpush1.msra.mxu0 0.0
    %230 = vmatprep.subr.mxu0 0.0
    %231 = vmatpush1.msra.mxu0 0.0
    %232 = vmatprep.subr.mxu0 0.0
    %233 = vmatpush1.msra.mxu0 0.0
    %234 = vmatprep.subr.mxu0 0.0
    %235 = vmatpush1.msra.mxu0 0.0
    %236 = vmatprep.subr.mxu0 0.0
    %237 = vmatpush1.msra.mxu0 0.0
    %238 = vmatprep.subr.mxu0 0.0
    %239 = vmatpush1.msra.mxu0 0.0
    %240 = vmatprep.subr.mxu0 0.0
    %241 = vmatpush1.msra.mxu0 0.0
    %242 = vmatprep.subr.mxu0 0.0
    %243 = vmatpush1.msra.mxu0 0.0
    %244 = vmatprep.subr.mxu0 0.0
    %245 = vmatpush1.msra.mxu0 0.0
    %246 = vmatprep.subr.mxu0 0.0
    %247 = vmatpush1.msra.mxu0 0.0
    %248 = vmatprep.subr.mxu0 0.0
    %249 = vmatpush1.msra.mxu0 0.0
    %250 = vmatprep.subr.mxu0 0.0
    %251 = vmatpush1.msra.mxu0 0.0
    %252 = vmatprep.subr.mxu0 0.0
    %253 = vmatpush1.msra.mxu0 0.0
    %254 = vmatprep.subr.mxu0 0.0
    %255 = vmatpush1.msra.mxu0 0.0
    %256 = vmatprep.mubr.f32.mxu0 0.0
    %257 = vmatmul.mubr.f32.gmra.mrb[0].mxu0 %v146
    %v258 = vpop.f32.mrb[0].mxu0
    %v259 = vadd.f32 %v185, %v258
    %v260 = vpop.f32.mrb[0].mxu0
    %v261 = vadd.f32 %v189, %v260
    %262 = vdwg.mxu0
    %v263 = vxor.u32 %v259, 2147483648
    %v264 = vxor.u32 %v261, 2147483648
    %v265 = vmul.f32 %v263, 1.442695
    %v266 = vpow.pop %v265
    %v267 = vmul.f32 %v264, 1.442695
    %v268 = vpow.pop %v267
    %v269 = vadd.f32 %v266, 1.0
    %v270 = vadd.f32 %v268, 1.0
    %v271 = vrcp.pop %v269
    %v272 = vmul.f32 1.0, %v271
    %v273 = vrcp.pop %v270
    %v274 = vmul.f32 1.0, %v273
    %v275 = vld [vmem:[#allocation5] sm:$0xff]
    %v276 = vld [vmem:[#allocation8 + $0x160] ss:$0 sm:$0xff]
    %vm277 = vcmp.eq.f32.partialorder %v275, 0.0
    %v278 = vsel %vm277, %v276, %v275
    %vm279 = vcmp.eq.f32.partialorder %v278, -2.0
    %v280 = vsel %vm279, %v276, %v278
    %v281 = vld [vmem:[#allocation8 + $0x150] sm:$0xff]
    %vm282 = vcmask 64512
    %v284 = vsel %vm282, %v280, 0
    %286 = vmatprep.subr.mxu0 0.0
    %287 = vmatpush1.msra.mxu0 %v281
    %288 = vmatprep.subr.mxu0 0.0
    %289 = vmatpush1.msra.mxu0 0.0
    %290 = vmatprep.subr.mxu0 0.0
    %291 = vmatpush1.msra.mxu0 0.0
    %292 = vmatprep.subr.mxu0 0.0
    %293 = vmatpush1.msra.mxu0 0.0
    %294 = vmatprep.subr.mxu0 0.0
    %295 = vmatpush1.msra.mxu0 0.0
    %296 = vmatprep.subr.mxu0 0.0
    %297 = vmatpush1.msra.mxu0 0.0
    %298 = vmatprep.subr.mxu0 0.0
    %299 = vmatpush1.msra.mxu0 0.0
    %300 = vmatprep.subr.mxu0 0.0
    %301 = vmatpush1.msra.mxu0 0.0
    %302 = vmatprep.subr.mxu0 0.0
    %303 = vmatpush1.msra.mxu0 0.0
    %304 = vmatprep.subr.mxu0 0.0
    %305 = vmatpush1.msra.mxu0 0.0
    %306 = vmatprep.subr.mxu0 0.0
    %307 = vmatpush1.msra.mxu0 0.0
    %308 = vmatprep.subr.mxu0 0.0
    %309 = vmatpush1.msra.mxu0 0.0
    %310 = vmatprep.subr.mxu0 0.0
    %311 = vmatpush1.msra.mxu0 0.0
    %312 = vmatprep.subr.mxu0 0.0
    %313 = vmatpush1.msra.mxu0 0.0
    %314 = vmatprep.subr.mxu0 0.0
    %315 = vmatpush1.msra.mxu0 0.0
    %316 = vmatprep.subr.mxu0 0.0
    %317 = vmatpush1.msra.mxu0 0.0
    %318 = vmatprep.subr.mxu0 0.0
    %319 = vmatpush1.msra.mxu0 0.0
    %320 = vmatprep.subr.mxu0 0.0
    %321 = vmatpush1.msra.mxu0 0.0
    %322 = vmatprep.subr.mxu0 0.0
    %323 = vmatpush1.msra.mxu0 0.0
    %324 = vmatprep.subr.mxu0 0.0
    %325 = vmatpush1.msra.mxu0 0.0
    %326 = vmatprep.subr.mxu0 0.0
    %327 = vmatpush1.msra.mxu0 0.0
    %328 = vmatprep.subr.mxu0 0.0
    %329 = vmatpush1.msra.mxu0 0.0
    %330 = vmatprep.subr.mxu0 0.0
    %331 = vmatpush1.msra.mxu0 0.0
    %332 = vmatprep.subr.mxu0 0.0
    %333 = vmatpush1.msra.mxu0 0.0
    %334 = vmatprep.subr.mxu0 0.0
    %335 = vmatpush1.msra.mxu0 0.0
    %336 = vmatprep.subr.mxu0 0.0
    %337 = vmatpush1.msra.mxu0 0.0
    %338 = vmatprep.subr.mxu0 0.0
    %339 = vmatpush1.msra.mxu0 0.0
    %340 = vmatprep.subr.mxu0 0.0
    %341 = vmatpush1.msra.mxu0 0.0
    %342 = vmatprep.subr.mxu0 0.0
    %343 = vmatpush1.msra.mxu0 0.0
    %344 = vmatprep.subr.mxu0 0.0
    %345 = vmatpush1.msra.mxu0 0.0
    %346 = vmatprep.subr.mxu0 0.0
    %347 = vmatpush1.msra.mxu0 0.0
    %348 = vmatprep.subr.mxu0 0.0
    %349 = vmatpush1.msra.mxu0 0.0
    %350 = vmatprep.mubr.f32.mxu0 0.0
    %351 = vmatmul.mubr.f32.gmra.mrb[0].mxu0 %v284
    %v352 = vpop.f32.mrb[0].mxu0
    %v353 = vadd.f32 0.0, %v352
    %v354 = vpop.f32.mrb[0].mxu0
    %355 = vdwg.mxu0
    %v356 = vadd.f32 %v272, %v274
    %v357 = vadd.f32 %v356, %v353
    %v358 = vld [vmem:[#allocation7] sm:$0xff]
    %v359 = vmul.f32 %v357, %v358
    %360 = vst [vmem:[#allocation10] sm:$0xff] %v359
    // Predicated region
    $region34: #{tpu_custom_call.1} parent=1 // pred_check
      _
    $region35: #{tpu_custom_call.1} parent=1 // pred_check_branch
      %362 = sbr.rel (0) target = $region37
    $region36: #{tpu_custom_call.1} parent=1 // pred_region
      %s364 = ssub.s32 128, 128
      %365 = vsyncadd [#allocation4], %s364
      %s367 = sshll.u32 [#allocation10], 4
      %s368 = int_to_ptr.vmem [resolvable:$true] %s367
      %370 = dma.vmem_to_hbm [thread:$0]  %s368, 128, %s4, [#allocation4]
    $region37: #{tpu_custom_call.1} parent=1 // pred_fallthru
      _
    // Predicated region
    $region38: #{tpu_custom_call.1} parent=1 // pred_check
      _
    $region39: #{tpu_custom_call.1} parent=1 // pred_check_branch
      %372 = sbr.rel (0) target = $region41
    $region40: #{tpu_custom_call.1} parent=1 // pred_region
      %373 = dma.done [#allocation4], 128
    $region41: #{tpu_custom_call.1} parent=1 // pred_fallthru
      _
    %374 = vsyncpa [#allocation3], 1
    %375 = vsyncpa [#allocation6], 1
    %376 = vsyncpa [#allocation9], 1
    %377 = vsyncpa [#allocation4], 1

</llo_original>
